<compile_context>
chip_gen: v7x
topology: tpu7x:2x2x1
jax: 0.10.0
libtpu: 0.0.40
codegen_flags: <defaults>
</compile_context>

<pallas_src>
import math
import functools

import jax
import jax.numpy as jnp
from jax import lax
from jax.experimental import pallas as pl
from jax.experimental.pallas import tpu as pltpu

LN_EPS = 1e-5  # nn.LayerNorm default


def _round_up(x, m):
    return ((x + m - 1) // m) * m


def _projection_head_kernel(x_ref, w1_ref, b1_ref, w2_ref, b2_ref,
                            gamma_ref, beta_ref, o_ref, *, p_real):
    # projection = x @ W1 + b1   (MXU, f32 accumulation; operands may be bf16)
    projected = jnp.dot(x_ref[...], w1_ref[...],
                        preferred_element_type=jnp.float32) + b1_ref[...]

    # exact GELU (erf form, matches PyTorch nn.GELU default), computed in f32.
    # TODO(synk): on v5e a tanh-approx GELU (EUP) would offload the VALU if the
    # accuracy budget allows; kept exact-erf to match the PyTorch module.
    h = 0.5 * projected * (1.0 + lax.erf(projected * (1.0 / math.sqrt(2.0))))

    # fc = gelu(projected) @ W2 + b2
    y = jnp.dot(h.astype(w2_ref.dtype), w2_ref[...],
                preferred_element_type=jnp.float32) + b2_ref[...]

    # dropout: inference mode -> identity
    # TODO(synk): training-mode dropout (random mask + 1/(1-p) scaling) not implemented.

    # residual (pre-GELU projection, as in the reference module)
    z = y + projected                                   # [tb, P_pad], f32

    # LayerNorm over the real (unpadded) feature lanes only.
    p_pad = z.shape[-1]
    inv_p = 1.0 / p_real
    if p_real == p_pad:
        mean = jnp.sum(z, axis=-1, keepdims=True) * inv_p
        cent = z - mean
    else:
        lane = lax.broadcasted_iota(jnp.int32, z.shape, 1)
        mask = lane < p_real
        mean = jnp.sum(jnp.where(mask, z, 0.0), axis=-1, keepdims=True) * inv_p
        cent = jnp.where(mask, z - mean, 0.0)
    var = jnp.sum(cent * cent, axis=-1, keepdims=True) * inv_p
    norm = cent * lax.rsqrt(var + LN_EPS)
    o_ref[...] = (norm * gamma_ref[...] + beta_ref[...]).astype(o_ref.dtype)


@functools.partial(jax.jit, static_argnames=("block_b", "mxu_dtype"))
def projection_head(x, w1, b1, w2, b2, gamma, beta, *,
                    block_b=256, mxu_dtype=jnp.bfloat16):
    """x: [B, E]. w1: [E, P], w2: [P, P]. Returns [B, P] in x.dtype."""
    B, E = x.shape
    P = w1.shape[1]
    out_dtype = x.dtype

    # Lane-dense feature dims.
    E_pad = _round_up(E, 128)
    P_pad = _round_up(P, 128)

    # Batch tile: >= 8 (sublane granule), <= requested block_b, and never larger
    # than the (rounded-up) batch so small batches still run with a 1-step grid.
    block_b = max(8, min(block_b, _round_up(B, 8)))
    B_pad = _round_up(B, block_b)

    # Zero-pad.  Padded W/b columns are zero, so padded feature lanes stay exactly
    # zero through both matmuls and the residual; LayerNorm masks them out.
    x_p = jnp.pad(x, ((0, B_pad - B), (0, E_pad - E))).astype(mxu_dtype)
    w1_p = jnp.pad(w1, ((0, E_pad - E), (0, P_pad - P))).astype(mxu_dtype)
    w2_p = jnp.pad(w2, ((0, P_pad - P), (0, P_pad - P))).astype(mxu_dtype)
    b1_p = jnp.pad(b1, (0, P_pad - P)).reshape(1, P_pad).astype(jnp.float32)
    b2_p = jnp.pad(b2, (0, P_pad - P)).reshape(1, P_pad).astype(jnp.float32)
    gamma_p = jnp.pad(gamma, (0, P_pad - P)).reshape(1, P_pad).astype(jnp.float32)
    beta_p = jnp.pad(beta, (0, P_pad - P)).reshape(1, P_pad).astype(jnp.float32)

    grid = (B_pad // block_b,)

    # Scoped-VMEM budget: double-buffered tiles + resident weights + f32 temporaries.
    wsize = jnp.dtype(mxu_dtype).itemsize
    needed = 2 * (block_b * E_pad * wsize          # x tiles
                  + block_b * P_pad * out_dtype.itemsize  # out tiles
                  + E_pad * P_pad * wsize          # W1
                  + P_pad * P_pad * wsize          # W2
                  + 4 * P_pad * 4)                 # b1/b2/gamma/beta
    needed += 6 * block_b * P_pad * 4              # headroom for f32 intermediates
    vmem_limit = int(max(needed, 32 * 1024 * 1024))

    kernel = functools.partial(_projection_head_kernel, p_real=P)

    out = pl.pallas_call(
        kernel,
        out_shape=jax.ShapeDtypeStruct((B_pad, P_pad), out_dtype),
        grid_spec=pltpu.PrefetchScalarGridSpec(
            num_scalar_prefetch=0,
            grid=grid,
            in_specs=[
                pl.BlockSpec((block_b, E_pad), lambda i: (i, 0)),   # x tile
                pl.BlockSpec((E_pad, P_pad), lambda i: (0, 0)),     # W1 (resident)
                pl.BlockSpec((1, P_pad), lambda i: (0, 0)),         # b1
                pl.BlockSpec((P_pad, P_pad), lambda i: (0, 0)),     # W2 (resident)
                pl.BlockSpec((1, P_pad), lambda i: (0, 0)),         # b2
                pl.BlockSpec((1, P_pad), lambda i: (0, 0)),         # gamma
                pl.BlockSpec((1, P_pad), lambda i: (0, 0)),         # beta
            ],
            out_specs=pl.BlockSpec((block_b, P_pad), lambda i: (i, 0)),
        ),
        compiler_params=pltpu.CompilerParams(
            dimension_semantics=("parallel",),
            vmem_limit_bytes=vmem_limit),
    )(x_p, w1_p, b1_p, w2_p, b2_p, gamma_p, beta_p)

    return out[:B, :P]


def _reference(x, w1, b1, w2, b2, gamma, beta):
    projected = x @ w1 + b1
    h = 0.5 * projected * (1.0 + lax.erf(projected / jnp.sqrt(2.0)))
    y = h @ w2 + b2
    z = y + projected
    mean = jnp.mean(z, -1, keepdims=True)
    var = jnp.mean((z - mean) ** 2, -1, keepdims=True)
    return (z - mean) / jnp.sqrt(var + LN_EPS) * gamma + beta


if __name__ == "__main__":
    # Small shapes: batch=8, embedding_dim=32, projection_dim=64
    B, E, P = 8, 32, 64

    key = jax.random.PRNGKey(0)
    kx, k1, kb1, k2, kb2 = jax.random.split(key, 5)

    x = jax.random.normal(kx, (B, E), dtype=jnp.float32)

    # Deterministic parameter init (PyTorch-Linear-like uniform ranges).
    lim1 = 1.0 / math.sqrt(E)
    w1 = jax.random.uniform(k1, (E, P), minval=-lim1, maxval=lim1, dtype=jnp.float32)
    b1 = jax.random.uniform(kb1, (P,), minval=-lim1, maxval=lim1, dtype=jnp.float32)
    lim2 = 1.0 / math.sqrt(P)
    w2 = jax.random.uniform(k2, (P, P), minval=-lim2, maxval=lim2, dtype=jnp.float32)
    b2 = jax.random.uniform(kb2, (P,), minval=-lim2, maxval=lim2, dtype=jnp.float32)
    gamma = jnp.ones((P,), dtype=jnp.float32)
    beta = jnp.zeros((P,), dtype=jnp.float32)

    ref = _reference(x, w1, b1, w2, b2, gamma, beta)

    # 1) f32-operand path: tight correctness check.
    out_f32 = projection_head(x, w1, b1, w2, b2, gamma, beta,
                              block_b=256, mxu_dtype=jnp.float32)
    out_f32 = jax.block_until_ready(out_f32)
    assert out_f32.shape == (B, P)
    assert jnp.allclose(out_f32, ref, atol=1e-3, rtol=1e-3), \
        f"f32 path max err {jnp.max(jnp.abs(out_f32 - ref))}"

    # 2) default bf16 MXU-operand path (fast path on v6e/v7x), f32 accumulation.
    out_bf16 = jax.block_until_ready(
        projection_head(x, w1, b1, w2, b2, gamma, beta))
    assert out_bf16.shape == (B, P)
    assert jnp.allclose(out_bf16, ref, atol=5e-2, rtol=5e-2), \
        f"bf16 path max err {jnp.max(jnp.abs(out_bf16 - ref))}"

    print("KERNEL_OK")
</pallas_src>

<mosaic_0001>
module attributes {stable_mosaic.version = 11 : i64} {
  func.func @_projection_head_kernel(%arg0: i32, %arg1: memref<8x128xf32, #tpu.memory_space<vmem>>, %arg2: memref<128x128xf32, #tpu.memory_space<vmem>>, %arg3: memref<1x128xf32, #tpu.memory_space<vmem>>, %arg4: memref<128x128xf32, #tpu.memory_space<vmem>>, %arg5: memref<1x128xf32, #tpu.memory_space<vmem>>, %arg6: memref<1x128xf32, #tpu.memory_space<vmem>>, %arg7: memref<1x128xf32, #tpu.memory_space<vmem>>, %arg8: memref<8x128xf32, #tpu.memory_space<vmem>>) attributes {dimension_semantics = [#tpu.dimension_semantics<parallel>], iteration_bounds = array<i64: 1>, scalar_prefetch = 0 : i64, scratch_operands = 0 : i64, tpu.core_type = #tpu.core_type<tc>, window_params = [{transform_indices = @transform_0, window_bounds = array<i64: 8, 128>}, {pipeline_mode = #tpu.pipeline_mode<synchronous>, transform_indices = @transform_1, window_bounds = array<i64: 128, 128>}, {pipeline_mode = #tpu.pipeline_mode<synchronous>, transform_indices = @transform_2, window_bounds = array<i64: 1, 128>}, {pipeline_mode = #tpu.pipeline_mode<synchronous>, transform_indices = @transform_3, window_bounds = array<i64: 128, 128>}, {pipeline_mode = #tpu.pipeline_mode<synchronous>, transform_indices = @transform_4, window_bounds = array<i64: 1, 128>}, {pipeline_mode = #tpu.pipeline_mode<synchronous>, transform_indices = @transform_5, window_bounds = array<i64: 1, 128>}, {pipeline_mode = #tpu.pipeline_mode<synchronous>, transform_indices = @transform_6, window_bounds = array<i64: 1, 128>}, {transform_indices = @transform_7, window_bounds = array<i64: 8, 128>}]} {
    %c0 = arith.constant 0 : index
    %c0_0 = arith.constant 0 : index
    %0 = vector.load %arg1[%c0, %c0_0] : memref<8x128xf32, #tpu.memory_space<vmem>>, vector<8x128xf32>
    %c0_1 = arith.constant 0 : index
    %c0_2 = arith.constant 0 : index
    %1 = vector.load %arg2[%c0_1, %c0_2] : memref<128x128xf32, #tpu.memory_space<vmem>>, vector<128x128xf32>
    %cst = arith.constant dense<0.000000e+00> : vector<8x128xf32>
    %2 = tpu.matmul %0, %1, %cst {dimension_numbers = #tpu.dot_dimension_numbers<[1], [0], [0], [1], [0, 0, 1, 1], [], []>} : vector<8x128xf32>, vector<128x128xf32>, vector<8x128xf32> -> vector<8x128xf32>
    %c0_3 = arith.constant 0 : index
    %c0_4 = arith.constant 0 : index
    %3 = vector.load %arg3[%c0_3, %c0_4] : memref<1x128xf32, #tpu.memory_space<vmem>>, vector<1x128xf32>
    %4 = vector.broadcast %3 : vector<1x128xf32> to vector<8x128xf32>
    %5 = arith.addf %2, %4 : vector<8x128xf32>
    %cst_5 = arith.constant 5.000000e-01 : f32
    %6 = vector.broadcast %cst_5 : f32 to vector<8x128xf32>
    %7 = arith.mulf %6, %5 : vector<8x128xf32>
    %cst_6 = arith.constant 0.707106769 : f32
    %8 = vector.broadcast %cst_6 : f32 to vector<8x128xf32>
    %9 = arith.mulf %5, %8 : vector<8x128xf32>
    %10 = math.erf %9 : vector<8x128xf32>
    %cst_7 = arith.constant 1.000000e+00 : f32
    %11 = vector.broadcast %cst_7 : f32 to vector<8x128xf32>
    %12 = arith.addf %11, %10 : vector<8x128xf32>
    %13 = arith.mulf %7, %12 : vector<8x128xf32>
    %c0_8 = arith.constant 0 : index
    %c0_9 = arith.constant 0 : index
    %14 = vector.load %arg4[%c0_8, %c0_9] : memref<128x128xf32, #tpu.memory_space<vmem>>, vector<128x128xf32>
    %cst_10 = arith.constant dense<0.000000e+00> : vector<8x128xf32>
    %15 = tpu.matmul %13, %14, %cst_10 {dimension_numbers = #tpu.dot_dimension_numbers<[1], [0], [0], [1], [0, 0, 1, 1], [], []>} : vector<8x128xf32>, vector<128x128xf32>, vector<8x128xf32> -> vector<8x128xf32>
    %c0_11 = arith.constant 0 : index
    %c0_12 = arith.constant 0 : index
    %16 = vector.load %arg5[%c0_11, %c0_12] : memref<1x128xf32, #tpu.memory_space<vmem>>, vector<1x128xf32>
    %17 = vector.broadcast %16 : vector<1x128xf32> to vector<8x128xf32>
    %18 = arith.addf %15, %17 : vector<8x128xf32>
    %19 = arith.addf %18, %5 : vector<8x128xf32>
    %20 = tpu.iota {dimensions = array<i32: 1>} : vector<8x128xi32>
    %c64_i32 = arith.constant 64 : i32
    %21 = vector.broadcast %c64_i32 : i32 to vector<8x128xi32>
    %22 = arith.cmpi slt, %20, %21 : vector<8x128xi32>
    %cst_13 = arith.constant 0.000000e+00 : f32
    %23 = vector.broadcast %cst_13 : f32 to vector<8x128xf32>
    %24 = arith.select %22, %19, %23 : vector<8x128xi1>, vector<8x128xf32>
    %cst_14 = arith.constant dense<0.000000e+00> : vector<8xf32>
    %25 = vector.multi_reduction <add>, %24, %cst_14 [1] : vector<8x128xf32> to vector<8xf32>
    %26 = vector.shape_cast %25 : vector<8xf32> to vector<8x1xf32>
    %cst_15 = arith.constant 1.562500e-02 : f32
    %27 = vector.broadcast %cst_15 : f32 to vector<8x1xf32>
    %28 = arith.mulf %26, %27 : vector<8x1xf32>
    %29 = vector.broadcast %28 : vector<8x1xf32> to vector<8x128xf32>
    %30 = arith.subf %19, %29 : vector<8x128xf32>
    %cst_16 = arith.constant 0.000000e+00 : f32
    %31 = vector.broadcast %cst_16 : f32 to vector<8x128xf32>
    %32 = arith.select %22, %30, %31 : vector<8x128xi1>, vector<8x128xf32>
    %33 = arith.mulf %32, %32 : vector<8x128xf32>
    %cst_17 = arith.constant dense<0.000000e+00> : vector<8xf32>
    %34 = vector.multi_reduction <add>, %33, %cst_17 [1] : vector<8x128xf32> to vector<8xf32>
    %35 = vector.shape_cast %34 : vector<8xf32> to vector<8x1xf32>
    %cst_18 = arith.constant 1.562500e-02 : f32
    %36 = vector.broadcast %cst_18 : f32 to vector<8x1xf32>
    %37 = arith.mulf %35, %36 : vector<8x1xf32>
    %cst_19 = arith.constant 9.99999974E-6 : f32
    %38 = vector.broadcast %cst_19 : f32 to vector<8x1xf32>
    %39 = arith.addf %37, %38 : vector<8x1xf32>
    %40 = math.rsqrt %39 : vector<8x1xf32>
    %41 = vector.broadcast %40 : vector<8x1xf32> to vector<8x128xf32>
    %42 = arith.mulf %32, %41 : vector<8x128xf32>
    %c0_20 = arith.constant 0 : index
    %c0_21 = arith.constant 0 : index
    %43 = vector.load %arg6[%c0_20, %c0_21] : memref<1x128xf32, #tpu.memory_space<vmem>>, vector<1x128xf32>
    %44 = vector.broadcast %43 : vector<1x128xf32> to vector<8x128xf32>
    %45 = arith.mulf %42, %44 : vector<8x128xf32>
    %c0_22 = arith.constant 0 : index
    %c0_23 = arith.constant 0 : index
    %46 = vector.load %arg7[%c0_22, %c0_23] : memref<1x128xf32, #tpu.memory_space<vmem>>, vector<1x128xf32>
    %47 = vector.broadcast %46 : vector<1x128xf32> to vector<8x128xf32>
    %48 = arith.addf %45, %47 : vector<8x128xf32>
    %c0_24 = arith.constant 0 : index
    %c0_25 = arith.constant 0 : index
    %49 = vector.load %arg8[%c0_24, %c0_25] : memref<8x128xf32, #tpu.memory_space<vmem>>, vector<8x128xf32>
    tpu.vector_store %arg8[%c0_24, %c0_25], %48 {strides = array<i32>} : memref<8x128xf32, #tpu.memory_space<vmem>>, vector<8x128xf32>,
    return
  }
  func.func @transform_0(%arg0: i32) -> (i32, i32) {
    %c0_i32 = arith.constant 0 : i32
    %c0_i32_0 = arith.constant 0 : i32
    return %arg0, %c0_i32 : i32, i32
  }
  func.func @transform_1(%arg0: i32) -> (i32, i32) {
    %c0_i32 = arith.constant 0 : i32
    %c0_i32_0 = arith.constant 0 : i32
    %c0_i32_1 = arith.constant 0 : i32
    return %c0_i32, %c0_i32_0 : i32, i32
  }
  func.func @transform_2(%arg0: i32) -> (i32, i32) {
    %c0_i32 = arith.constant 0 : i32
    %c0_i32_0 = arith.constant 0 : i32
    %c0_i32_1 = arith.constant 0 : i32
    return %c0_i32, %c0_i32_0 : i32, i32
  }
  func.func @transform_3(%arg0: i32) -> (i32, i32) {
    %c0_i32 = arith.constant 0 : i32
    %c0_i32_0 = arith.constant 0 : i32
    %c0_i32_1 = arith.constant 0 : i32
    return %c0_i32, %c0_i32_0 : i32, i32
  }
  func.func @transform_4(%arg0: i32) -> (i32, i32) {
    %c0_i32 = arith.constant 0 : i32
    %c0_i32_0 = arith.constant 0 : i32
    %c0_i32_1 = arith.constant 0 : i32
    return %c0_i32, %c0_i32_0 : i32, i32
  }
  func.func @transform_5(%arg0: i32) -> (i32, i32) {
    %c0_i32 = arith.constant 0 : i32
    %c0_i32_0 = arith.constant 0 : i32
    %c0_i32_1 = arith.constant 0 : i32
    return %c0_i32, %c0_i32_0 : i32, i32
  }
  func.func @transform_6(%arg0: i32) -> (i32, i32) {
    %c0_i32 = arith.constant 0 : i32
    %c0_i32_0 = arith.constant 0 : i32
    %c0_i32_1 = arith.constant 0 : i32
    return %c0_i32, %c0_i32_0 : i32, i32
  }
  func.func @transform_7(%arg0: i32) -> (i32, i32) {
    %c0_i32 = arith.constant 0 : i32
    %c0_i32_0 = arith.constant 0 : i32
    return %arg0, %c0_i32 : i32, i32
  }
}

</mosaic_0001>

<llo_original>
// kernel: projection_head.1
$region0: #{projection_head.1}
  #allocation0 [shape = 'u32[]', space=smem, size = 0x4, offset = 0x4, fixed_abs, tag = 'smem constant byte address 0x4 - core index']
  #allocation1 [shape = 'u32[144,128]{1,0:T(1,128)}', space=vmem, size = 0x12000, scoped, tag = 'internal scratch']
  %s0 = inlined_call_operand.vmem [shape: f32[8,128], index: 0, kind: input, shape index: {}]
  %s1 = inlined_call_operand.vmem [shape: f32[128,128], index: 1, kind: input, shape index: {}]
  %s2 = inlined_call_operand.vmem [shape: f32[1,128], index: 2, kind: input, shape index: {}]
  %s3 = inlined_call_operand.vmem [shape: f32[128,128], index: 3, kind: input, shape index: {}]
  %s4 = inlined_call_operand.vmem [shape: f32[1,128], index: 4, kind: input, shape index: {}]
  %s5 = inlined_call_operand.vmem [shape: f32[1,128], index: 5, kind: input, shape index: {}]
  %s6 = inlined_call_operand.vmem [shape: f32[1,128], index: 6, kind: input, shape index: {}]
  %s7 = inlined_call_operand.hbm [shape: f32[8,128], index: 7, kind: output, shape index: {}]
  %s8 = sld [smem:[#allocation0]]
  $region38: #{projection_head.1} parent=0
    _
  %s10 = ssub.s32 1, %s8
  %s11 = scalar_select 0, %s10, %s8
  $region1: #{projection_head.1} parent=0
    #allocation2 [shape = 'u8[4096]{0}', space=vmem, size = 0x1000, scoped, tag = 'output window, operand 0, single buffered']
    #allocation3 [shape = 's32[1]{0}', space=sflag, size = 0x4, scoped, tag = 'scoped memory for projection_head.1']
    %12 = vsyncpa [#allocation3], 0
    // Predicated region
    $region2: #{projection_head.1} parent=1 // pred_check
      _
    $region3: #{projection_head.1} parent=1 // pred_check_branch
      %14 = sbr.rel (0) target = $region5
    $region4: #{projection_head.1} parent=1 // pred_region
      _
    $region5: #{projection_head.1} parent=1 // pred_fallthru
      _
    // Predicated region
    $region6: #{projection_head.1} parent=1 // pred_check
      _
    $region7: #{projection_head.1} parent=1 // pred_check_branch
      %16 = sbr.rel (0) target = $region9
    $region8: #{projection_head.1} parent=1 // pred_region
      _
    $region9: #{projection_head.1} parent=1 // pred_fallthru
      _
    // Predicated region
    $region10: #{projection_head.1} parent=1 // pred_check
      _
    $region11: #{projection_head.1} parent=1 // pred_check_branch
      %18 = sbr.rel (0) target = $region13
    $region12: #{projection_head.1} parent=1 // pred_region
      _
    $region13: #{projection_head.1} parent=1 // pred_fallthru
      _
    // Predicated region
    $region14: #{projection_head.1} parent=1 // pred_check
      _
    $region15: #{projection_head.1} parent=1 // pred_check_branch
      %20 = sbr.rel (0) target = $region17
    $region16: #{projection_head.1} parent=1 // pred_region
      _
    $region17: #{projection_head.1} parent=1 // pred_fallthru
      _
    // Predicated region
    $region18: #{projection_head.1} parent=1 // pred_check
      _
    $region19: #{projection_head.1} parent=1 // pred_check_branch
      %22 = sbr.rel (0) target = $region21
    $region20: #{projection_head.1} parent=1 // pred_region
      _
    $region21: #{projection_head.1} parent=1 // pred_fallthru
      _
    // Predicated region
    $region22: #{projection_head.1} parent=1 // pred_check
      _
    $region23: #{projection_head.1} parent=1 // pred_check_branch
      %24 = sbr.rel (0) target = $region25
    $region24: #{projection_head.1} parent=1 // pred_region
      _
    $region25: #{projection_head.1} parent=1 // pred_fallthru
      _
    // Predicated region
    $region26: #{projection_head.1} parent=1 // pred_check
      _
    $region27: #{projection_head.1} parent=1 // pred_check_branch
      %26 = sbr.rel (0) target = $region29
    $region28: #{projection_head.1} parent=1 // pred_region
      _
    $region29: #{projection_head.1} parent=1 // pred_fallthru
      _
    %v27 = vld [vmem:[%s0] sm:$0xff]
    %v28 = vld [vmem:[%s1] sm:$0xff]
    %v29 = vld [vmem:[%s1 + $0x8] sm:$0xff]
    %v30 = vld [vmem:[%s1 + $0x10] sm:$0xff]
    %v31 = vld [vmem:[%s1 + $0x18] sm:$0xff]
    %v32 = vld [vmem:[%s1 + $0x20] sm:$0xff]
    %v33 = vld [vmem:[%s1 + $0x28] sm:$0xff]
    %v34 = vld [vmem:[%s1 + $0x30] sm:$0xff]
    %v35 = vld [vmem:[%s1 + $0x38] sm:$0xff]
    %v36 = vld [vmem:[%s1 + $0x40] sm:$0xff]
    %v37 = vld [vmem:[%s1 + $0x48] sm:$0xff]
    %v38 = vld [vmem:[%s1 + $0x50] sm:$0xff]
    %v39 = vld [vmem:[%s1 + $0x58] sm:$0xff]
    %v40 = vld [vmem:[%s1 + $0x60] sm:$0xff]
    %v41 = vld [vmem:[%s1 + $0x68] sm:$0xff]
    %v42 = vld [vmem:[%s1 + $0x70] sm:$0xff]
    %v43 = vld [vmem:[%s1 + $0x78] sm:$0xff]
    %v44 = vld [vmem:[%s2] sm:$0x1]
    %v46 = vlaneseq
    %v47 = vshrl.u32 %v46, 7
    %v48 = vsub.s32 0, %v47
    %v49 = vrot.slane %v44, %v48
    %51 = vmatprep.subr.mxu0 0.0
    %52 = vmatpush1.msra.mxu0 %v28
    %53 = vmatprep.subr.mxu0 0.0
    %54 = vmatpush1.msra.mxu0 %v29
    %55 = vmatprep.subr.mxu0 0.0
    %56 = vmatpush1.msra.mxu0 %v30
    %57 = vmatprep.subr.mxu0 0.0
    %58 = vmatpush1.msra.mxu0 %v31
    %59 = vmatprep.subr.mxu0 0.0
    %60 = vmatpush1.msra.mxu0 %v32
    %61 = vmatprep.subr.mxu0 0.0
    %62 = vmatpush1.msra.mxu0 %v33
    %63 = vmatprep.subr.mxu0 0.0
    %64 = vmatpush1.msra.mxu0 %v34
    %65 = vmatprep.subr.mxu0 0.0
    %66 = vmatpush1.msra.mxu0 %v35
    %67 = vmatprep.subr.mxu0 0.0
    %68 = vmatpush1.msra.mxu0 %v36
    %69 = vmatprep.subr.mxu0 0.0
    %70 = vmatpush1.msra.mxu0 %v37
    %71 = vmatprep.subr.mxu0 0.0
    %72 = vmatpush1.msra.mxu0 %v38
    %73 = vmatprep.subr.mxu0 0.0
    %74 = vmatpush1.msra.mxu0 %v39
    %75 = vmatprep.subr.mxu0 0.0
    %76 = vmatpush1.msra.mxu0 %v40
    %77 = vmatprep.subr.mxu0 0.0
    %78 = vmatpush1.msra.mxu0 %v41
    %79 = vmatprep.subr.mxu0 0.0
    %80 = vmatpush1.msra.mxu0 %v42
    %81 = vmatprep.subr.mxu0 0.0
    %82 = vmatpush1.msra.mxu0 %v43
    %83 = vmatprep.subr.mxu0 0.0
    %84 = vmatpush1.msra.mxu0 0.0
    %85 = vmatprep.subr.mxu0 0.0
    %86 = vmatpush1.msra.mxu0 0.0
    %87 = vmatprep.subr.mxu0 0.0
    %88 = vmatpush1.msra.mxu0 0.0
    %89 = vmatprep.subr.mxu0 0.0
    %90 = vmatpush1.msra.mxu0 0.0
    %91 = vmatprep.subr.mxu0 0.0
    %92 = vmatpush1.msra.mxu0 0.0
    %93 = vmatprep.subr.mxu0 0.0
    %94 = vmatpush1.msra.mxu0 0.0
    %95 = vmatprep.subr.mxu0 0.0
    %96 = vmatpush1.msra.mxu0 0.0
    %97 = vmatprep.subr.mxu0 0.0
    %98 = vmatpush1.msra.mxu0 0.0
    %99 = vmatprep.subr.mxu0 0.0
    %100 = vmatpush1.msra.mxu0 0.0
    %101 = vmatprep.subr.mxu0 0.0
    %102 = vmatpush1.msra.mxu0 0.0
    %103 = vmatprep.subr.mxu0 0.0
    %104 = vmatpush1.msra.mxu0 0.0
    %105 = vmatprep.subr.mxu0 0.0
    %106 = vmatpush1.msra.mxu0 0.0
    %107 = vmatprep.subr.mxu0 0.0
    %108 = vmatpush1.msra.mxu0 0.0
    %109 = vmatprep.subr.mxu0 0.0
    %110 = vmatpush1.msra.mxu0 0.0
    %111 = vmatprep.subr.mxu0 0.0
    %112 = vmatpush1.msra.mxu0 0.0
    %113 = vmatprep.subr.mxu0 0.0
    %114 = vmatpush1.msra.mxu0 0.0
    %115 = vmatprep.mubr.f32.mxu0 0.0
    %116 = vmatmul.mubr.f32.gmra.mrb[0].mxu0 %v27
    %v117 = vpop.f32.mrb[0].mxu0
    %v118 = vadd.f32 %v49, %v117
    %v119 = vpop.f32.mrb[0].mxu0
    %120 = vdwg.mxu0
    %v121 = vmul.f32 %v118, 0.5
    %v122 = vmul.f32 %v118, 0.70710677
    %v123 = verf.f32.pop %v122
    %v124 = vadd.f32 %v123, 1.0
    %v125 = vmul.f32 %v121, %v124
    %v126 = vld [vmem:[%s3] sm:$0xff]
    %v127 = vld [vmem:[%s3 + $0x8] sm:$0xff]
    %v128 = vld [vmem:[%s3 + $0x10] sm:$0xff]
    %v129 = vld [vmem:[%s3 + $0x18] sm:$0xff]
    %v130 = vld [vmem:[%s3 + $0x20] sm:$0xff]
    %v131 = vld [vmem:[%s3 + $0x28] sm:$0xff]
    %v132 = vld [vmem:[%s3 + $0x30] sm:$0xff]
    %v133 = vld [vmem:[%s3 + $0x38] sm:$0xff]
    %v134 = vld [vmem:[%s3 + $0x40] sm:$0xff]
    %v135 = vld [vmem:[%s3 + $0x48] sm:$0xff]
    %v136 = vld [vmem:[%s3 + $0x50] sm:$0xff]
    %v137 = vld [vmem:[%s3 + $0x58] sm:$0xff]
    %v138 = vld [vmem:[%s3 + $0x60] sm:$0xff]
    %v139 = vld [vmem:[%s3 + $0x68] sm:$0xff]
    %v140 = vld [vmem:[%s3 + $0x70] sm:$0xff]
    %v141 = vld [vmem:[%s3 + $0x78] sm:$0xff]
    %v142 = vld [vmem:[%s4] sm:$0x1]
    %v144 = vlaneseq
    %v145 = vshrl.u32 %v144, 7
    %v146 = vsub.s32 0, %v145
    %v147 = vrot.slane %v142, %v146
    %149 = vmatprep.subr.mxu0 0.0
    %150 = vmatpush1.msra.mxu0 %v126
    %151 = vmatprep.subr.mxu0 0.0
    %152 = vmatpush1.msra.mxu0 %v127
    %153 = vmatprep.subr.mxu0 0.0
    %154 = vmatpush1.msra.mxu0 %v128
    %155 = vmatprep.subr.mxu0 0.0
    %156 = vmatpush1.msra.mxu0 %v129
    %157 = vmatprep.subr.mxu0 0.0
    %158 = vmatpush1.msra.mxu0 %v130
    %159 = vmatprep.subr.mxu0 0.0
    %160 = vmatpush1.msra.mxu0 %v131
    %161 = vmatprep.subr.mxu0 0.0
    %162 = vmatpush1.msra.mxu0 %v132
    %163 = vmatprep.subr.mxu0 0.0
    %164 = vmatpush1.msra.mxu0 %v133
    %165 = vmatprep.subr.mxu0 0.0
    %166 = vmatpush1.msra.mxu0 %v134
    %167 = vmatprep.subr.mxu0 0.0
    %168 = vmatpush1.msra.mxu0 %v135
    %169 = vmatprep.subr.mxu0 0.0
    %170 = vmatpush1.msra.mxu0 %v136
    %171 = vmatprep.subr.mxu0 0.0
    %172 = vmatpush1.msra.mxu0 %v137
    %173 = vmatprep.subr.mxu0 0.0
    %174 = vmatpush1.msra.mxu0 %v138
    %175 = vmatprep.subr.mxu0 0.0
    %176 = vmatpush1.msra.mxu0 %v139
    %177 = vmatprep.subr.mxu0 0.0
    %178 = vmatpush1.msra.mxu0 %v140
    %179 = vmatprep.subr.mxu0 0.0
    %180 = vmatpush1.msra.mxu0 %v141
    %181 = vmatprep.subr.mxu0 0.0
    %182 = vmatpush1.msra.mxu0 0.0
    %183 = vmatprep.subr.mxu0 0.0
    %184 = vmatpush1.msra.mxu0 0.0
    %185 = vmatprep.subr.mxu0 0.0
    %186 = vmatpush1.msra.mxu0 0.0
    %187 = vmatprep.subr.mxu0 0.0
    %188 = vmatpush1.msra.mxu0 0.0
    %189 = vmatprep.subr.mxu0 0.0
    %190 = vmatpush1.msra.mxu0 0.0
    %191 = vmatprep.subr.mxu0 0.0
    %192 = vmatpush1.msra.mxu0 0.0
    %193 = vmatprep.subr.mxu0 0.0
    %194 = vmatpush1.msra.mxu0 0.0
    %195 = vmatprep.subr.mxu0 0.0
    %196 = vmatpush1.msra.mxu0 0.0
    %197 = vmatprep.subr.mxu0 0.0
    %198 = vmatpush1.msra.mxu0 0.0
    %199 = vmatprep.subr.mxu0 0.0
    %200 = vmatpush1.msra.mxu0 0.0
    %201 = vmatprep.subr.mxu0 0.0
    %202 = vmatpush1.msra.mxu0 0.0
    %203 = vmatprep.subr.mxu0 0.0
    %204 = vmatpush1.msra.mxu0 0.0
    %205 = vmatprep.subr.mxu0 0.0
    %206 = vmatpush1.msra.mxu0 0.0
    %207 = vmatprep.subr.mxu0 0.0
    %208 = vmatpush1.msra.mxu0 0.0
    %209 = vmatprep.subr.mxu0 0.0
    %210 = vmatpush1.msra.mxu0 0.0
    %211 = vmatprep.subr.mxu0 0.0
    %212 = vmatpush1.msra.mxu0 0.0
    %213 = vmatprep.mubr.f32.mxu0 0.0
    %214 = vmatmul.mubr.f32.gmra.mrb[0].mxu0 %v125
    %v215 = vpop.f32.mrb[0].mxu0
    %v216 = vadd.f32 %v147, %v215
    %v217 = vpop.f32.mrb[0].mxu0
    %218 = vdwg.mxu0
    %v219 = vadd.f32 %v216, %v118
    %v220 = vlaneseq
    %v221 = vand.u32 %v220, 127
    %vm222 = vcmp.lt.s32.totalorder %v221, 64
    %v223 = vsel %vm222, %v219, 0.0
    %224 = vadd.xlane.f32.xlu0 %v223
    %v225 = vpop.xlane.xlu0 %224
    %v226 = vmul.f32 %v225, 0.015625
    %v227 = vsub.f32 %v219, %v226
    %v228 = vsel %vm222, %v227, 0.0
    %v229 = vmul.f32 %v228, %v228
    %230 = vadd.xlane.f32.xlu0 %v229
    %v231 = vpop.xlane.xlu0 %230
    %v232 = vmul.f32 %v231, 0.015625
    %v233 = vadd.f32 %v232, 1e-05
    %v234 = vrsqrt.pop %v233
    %v235 = vmul.f32 %v228, %v234
    %v236 = vld [vmem:[%s5] sm:$0x1]
    %v238 = vlaneseq
    %v239 = vshrl.u32 %v238, 7
    %v240 = vsub.s32 0, %v239
    %v241 = vrot.slane %v236, %v240
    %v243 = vmul.f32 %v235, %v241
    %v244 = vld [vmem:[%s6] sm:$0x1]
    %v246 = vlaneseq
    %v247 = vshrl.u32 %v246, 7
    %v248 = vsub.s32 0, %v247
    %v249 = vrot.slane %v244, %v248
    %v251 = vadd.f32 %v243, %v249
    %252 = vst [vmem:[#allocation2] sm:$0xff] %v251
    // Predicated region
    $region30: #{projection_head.1} parent=1 // pred_check
      _
    $region31: #{projection_head.1} parent=1 // pred_check_branch
      %254 = sbr.rel (0) target = $region33
    $region32: #{projection_head.1} parent=1 // pred_region
      %s256 = ssub.s32 128, 128
      %257 = vsyncadd [#allocation3], %s256
      %s259 = sshll.u32 [#allocation2], 4
      %s260 = int_to_ptr.vmem [resolvable:$true] %s259
      %262 = dma.vmem_to_hbm [thread:$0]  %s260, 128, %s7, [#allocation3]
    $region33: #{projection_head.1} parent=1 // pred_fallthru
      _
    // Predicated region
    $region34: #{projection_head.1} parent=1 // pred_check
      _
    $region35: #{projection_head.1} parent=1 // pred_check_branch
      %264 = sbr.rel (0) target = $region37
    $region36: #{projection_head.1} parent=1 // pred_region
      %265 = dma.done [#allocation3], 128
    $region37: #{projection_head.1} parent=1 // pred_fallthru
      _
    %266 = vsyncpa [#allocation3], 1

</llo_original>
